<compile_context>
chip_gen: v7x
topology: tpu7x:2x2x1
jax: 0.10.0
libtpu: 0.0.40
codegen_flags: <defaults>
</compile_context>

<pallas_src>
import jax
import jax.numpy as jnp
from jax.experimental import pallas as pl
from jax.experimental.pallas import tpu as pltpu


def _outconv_kernel(x_ref, w_ref, b_ref, o_ref):
    # x_ref: (nb, C_in, rows, lane)  VMEM
    # w_ref: (C_out, C_in)           SMEM (read as scalars)
    # b_ref: (C_out,)                SMEM (read as scalars)
    # o_ref: (nb, C_out, rows, lane) VMEM
    c_out, c_in = w_ref.shape
    for co in range(c_out):
        # Unrolled VPU multiply-accumulate over the input channels.
        # Channel slices are outer-dim slices -> dense (8,128)-tiled vregs.
        acc = x_ref[:, 0:1, :, :].astype(jnp.float32) * w_ref[co, 0]
        for ci in range(1, c_in):
            acc = acc + x_ref[:, ci:ci + 1, :, :].astype(jnp.float32) * w_ref[co, ci]
        o_ref[:, co:co + 1, :, :] = (acc + b_ref[co]).astype(o_ref.dtype)


def _largest_divisor(n, cap, multiple_of=1):
    """Largest d with d | n, d <= cap and multiple_of | d.  None if no such d."""
    cap = min(n, cap)
    for d in range(cap, 0, -1):
        if n % d == 0 and d % multiple_of == 0:
            return d
    return None


def outconv_forward(x_nchw, weight, bias):
    """1x1 conv forward, NCHW in / NCHW out (matches nn.Conv2d(in_ch, out_ch, 1)).

    x_nchw: (N, C_in, H, W)
    weight: (C_out, C_in) or (C_out, C_in, 1, 1)
    bias:   (C_out,)
    returns (N, C_out, H, W)
    """
    N, C_in, H, W = x_nchw.shape
    if weight.ndim == 4:
        weight = weight.reshape(weight.shape[0], weight.shape[1])
    C_out = weight.shape[0]
    hw = H * W
    dtype = x_nchw.dtype
    itemsize = jnp.dtype(dtype).itemsize

    # ---- Layout: free reshape so spatial fills both sublanes and lanes. ----
    if hw % 128 == 0:
        lane, rows = 128, hw // 128
    else:
        lane, rows = hw, 1            # full-dim lane block (odd / tiny images)
    x4 = x_nchw.reshape(N, C_in, rows, lane)

    # ---- Generation-aware tile targets (pure HBM-bandwidth op). ----
    try:
        vmem_cap = int(pltpu.get_tpu_info().vmem_capacity_bytes)
    except Exception:
        vmem_cap = 64 << 20           # conservative default (v7x per-TC)
    vmem_cap = max(vmem_cap, 32 << 20)
    # Double-buffered working-set target: ~16 MiB on 64-MiB-VMEM parts (v7x),
    # ~32 MiB on 128-MiB parts (v5e/v6e).
    target_working = (32 << 20) if vmem_cap >= (96 << 20) else (16 << 20)
    # Double-buffered in+out bytes per (image x one 128-lane row):
    bytes_per_row = 2 * (C_in + C_out) * lane * itemsize
    target_rows_per_step = max(1, target_working // bytes_per_row)   # nb * rows_block

    # ---- Row tile: multiple of 8 that divides `rows` exactly (no pad/slice). ----
    if rows <= target_rows_per_step:
        rows_block = rows
    else:
        rows_block = _largest_divisor(rows, target_rows_per_step, multiple_of=8)
        if rows_block is None:
            # TODO(synk): pathological `rows` (huge with <3 factors of 2) falls
            # back to a full-dim block and may exceed the per-generation target.
            rows_block = rows

    # ---- Fold several batch images per step when images are small. ----
    nb = _largest_divisor(N, max(1, target_rows_per_step // rows_block)) or 1
    n_row_tiles = rows // rows_block

    # v7x shards the parallel grid over 2 TensorCores: ensure >= 2 grid steps
    # whenever the work can be split (harmless on single-TC v5e/v6e).
    if (N // nb) * n_row_tiles < 2:
        if nb > 1:
            nb = _largest_divisor(N, nb // 2) or 1
        elif lane == 128:
            half = _largest_divisor(rows, max(8, rows // 2), multiple_of=8)
            if half is not None and half < rows:
                rows_block = half
                n_row_tiles = rows // rows_block

    grid = (N // nb, n_row_tiles)

    # ---- VMEM budget from PHYSICAL (sublane/lane padded) block sizes. ----
    row_tile = 8 * max(1, 4 // itemsize)                 # rows per (8,128) tile
    rows_phys = pl.cdiv(rows_block, row_tile) * row_tile
    lane_phys = pl.cdiv(lane, 128) * 128
    block_in = nb * C_in * rows_phys * lane_phys * itemsize
    block_out = nb * C_out * rows_phys * lane_phys * itemsize
    working = 2 * (block_in + block_out)                 # double-buffered in + out
    vmem_limit = int(min(max(working * 3 // 2 + (1 << 20), 16 << 20),
                         vmem_cap * 3 // 4))

    w_f32 = weight.astype(jnp.float32)
    b_f32 = bias.astype(jnp.float32)

    out4 = pl.pallas_call(
        _outconv_kernel,
        out_shape=jax.ShapeDtypeStruct((N, C_out, rows, lane), dtype),
        grid_spec=pltpu.PrefetchScalarGridSpec(
            num_scalar_prefetch=0,
            grid=grid,
            in_specs=[
                pl.BlockSpec((nb, C_in, rows_block, lane),
                             lambda n, r: (n, 0, r, 0)),
                # Tiny weight / bias live in SMEM, read as scalars in-kernel.
                pl.BlockSpec(memory_space=pltpu.MemorySpace.SMEM),
                pl.BlockSpec(memory_space=pltpu.MemorySpace.SMEM),
            ],
            out_specs=pl.BlockSpec((nb, C_out, rows_block, lane),
                                   lambda n, r: (n, 0, r, 0)),
        ),
        compiler_params=pltpu.CompilerParams(
            dimension_semantics=("parallel", "parallel"),
            vmem_limit_bytes=vmem_limit,
        ),
    )(x4, w_f32, b_f32)

    # Free reshape back to NCHW (no padding was added, no slice needed).
    return out4.reshape(N, C_out, H, W)


if __name__ == "__main__":
    # Shapes consistent with outconv(in_ch=4, out_ch=3) on a (2, 4, 16, 16) input.
    N, C_in, H, W = 2, 4, 16, 16
    C_out = 3

    key = jax.random.PRNGKey(0)
    kx, kw, kb = jax.random.split(key, 3)

    x = jax.random.normal(kx, (N, C_in, H, W), dtype=jnp.float32)
    bound = 1.0 / (C_in ** 0.5)
    weight = jax.random.uniform(kw, (C_out, C_in), jnp.float32, -bound, bound)
    bias = jax.random.uniform(kb, (C_out,), jnp.float32, -bound, bound)

    out = outconv_forward(x, weight, bias)
    out = jax.block_until_ready(out)

    # Reference: 1x1 conv == channel einsum + bias.
    ref = jnp.einsum("nchw,oc->nohw", x, weight) + bias[None, :, None, None]
    assert out.shape == (N, C_out, H, W)
    assert jnp.allclose(out, ref, atol=1e-5, rtol=1e-5)

    print("KERNEL_OK")
</pallas_src>

<mosaic_0001>
module attributes {stable_mosaic.version = 11 : i64} {
  func.func @_outconv_kernel(%arg0: i32, %arg1: i32, %arg2: memref<1x4x2x128xf32, #tpu.memory_space<vmem>>, %arg3: memref<3x4xf32, #tpu.memory_space<smem>>, %arg4: memref<3xf32, #tpu.memory_space<smem>>, %arg5: memref<1x3x2x128xf32, #tpu.memory_space<vmem>>) attributes {dimension_semantics = [#tpu.dimension_semantics<parallel>, #tpu.dimension_semantics<parallel>], iteration_bounds = array<i64: 2, 1>, scalar_prefetch = 0 : i64, scratch_operands = 0 : i64, tpu.core_type = #tpu.core_type<tc>, window_params = [{transform_indices = @transform_0, window_bounds = array<i64: 1, 4, 2, 128>}, {transform_indices = @transform_1, window_bounds = array<i64: 3, 4>}, {transform_indices = @transform_2, window_bounds = array<i64: 3>}, {transform_indices = @transform_3, window_bounds = array<i64: 1, 3, 2, 128>}]} {
    %c0 = arith.constant 0 : index
    %c0_0 = arith.constant 0 : index
    %c0_1 = arith.constant 0 : index
    %c0_2 = arith.constant 0 : index
    %0 = vector.load %arg2[%c0, %c0_0, %c0_1, %c0_2] : memref<1x4x2x128xf32, #tpu.memory_space<vmem>>, vector<1x1x2x128xf32>
    %c0_3 = arith.constant 0 : index
    %c0_4 = arith.constant 0 : index
    %1 = memref.load %arg3[%c0_3, %c0_4] : memref<3x4xf32, #tpu.memory_space<smem>>
    %2 = vector.broadcast %1 : f32 to vector<1x1x2x128xf32>
    %3 = arith.mulf %0, %2 : vector<1x1x2x128xf32>
    %c0_5 = arith.constant 0 : index
    %c1 = arith.constant 1 : index
    %c0_6 = arith.constant 0 : index
    %c0_7 = arith.constant 0 : index
    %4 = vector.load %arg2[%c0_5, %c1, %c0_6, %c0_7] : memref<1x4x2x128xf32, #tpu.memory_space<vmem>>, vector<1x1x2x128xf32>
    %c0_8 = arith.constant 0 : index
    %c1_9 = arith.constant 1 : index
    %5 = memref.load %arg3[%c0_8, %c1_9] : memref<3x4xf32, #tpu.memory_space<smem>>
    %6 = vector.broadcast %5 : f32 to vector<1x1x2x128xf32>
    %7 = arith.mulf %4, %6 : vector<1x1x2x128xf32>
    %8 = arith.addf %3, %7 : vector<1x1x2x128xf32>
    %c0_10 = arith.constant 0 : index
    %c2 = arith.constant 2 : index
    %c0_11 = arith.constant 0 : index
    %c0_12 = arith.constant 0 : index
    %9 = vector.load %arg2[%c0_10, %c2, %c0_11, %c0_12] : memref<1x4x2x128xf32, #tpu.memory_space<vmem>>, vector<1x1x2x128xf32>
    %c0_13 = arith.constant 0 : index
    %c2_14 = arith.constant 2 : index
    %10 = memref.load %arg3[%c0_13, %c2_14] : memref<3x4xf32, #tpu.memory_space<smem>>
    %11 = vector.broadcast %10 : f32 to vector<1x1x2x128xf32>
    %12 = arith.mulf %9, %11 : vector<1x1x2x128xf32>
    %13 = arith.addf %8, %12 : vector<1x1x2x128xf32>
    %c0_15 = arith.constant 0 : index
    %c3 = arith.constant 3 : index
    %c0_16 = arith.constant 0 : index
    %c0_17 = arith.constant 0 : index
    %14 = vector.load %arg2[%c0_15, %c3, %c0_16, %c0_17] : memref<1x4x2x128xf32, #tpu.memory_space<vmem>>, vector<1x1x2x128xf32>
    %c0_18 = arith.constant 0 : index
    %c3_19 = arith.constant 3 : index
    %15 = memref.load %arg3[%c0_18, %c3_19] : memref<3x4xf32, #tpu.memory_space<smem>>
    %16 = vector.broadcast %15 : f32 to vector<1x1x2x128xf32>
    %17 = arith.mulf %14, %16 : vector<1x1x2x128xf32>
    %18 = arith.addf %13, %17 : vector<1x1x2x128xf32>
    %c0_20 = arith.constant 0 : index
    %19 = memref.load %arg4[%c0_20] : memref<3xf32, #tpu.memory_space<smem>>
    %20 = vector.broadcast %19 : f32 to vector<1x1x2x128xf32>
    %21 = arith.addf %18, %20 : vector<1x1x2x128xf32>
    %c0_21 = arith.constant 0 : index
    %c0_22 = arith.constant 0 : index
    %c0_23 = arith.constant 0 : index
    %c0_24 = arith.constant 0 : index
    %22 = vector.load %arg5[%c0_21, %c0_22, %c0_23, %c0_24] : memref<1x3x2x128xf32, #tpu.memory_space<vmem>>, vector<1x1x2x128xf32>
    tpu.vector_store %arg5[%c0_21, %c0_22, %c0_23, %c0_24], %21 {strides = array<i32>} : memref<1x3x2x128xf32, #tpu.memory_space<vmem>>, vector<1x1x2x128xf32>,
    %c0_25 = arith.constant 0 : index
    %c0_26 = arith.constant 0 : index
    %c0_27 = arith.constant 0 : index
    %c0_28 = arith.constant 0 : index
    %23 = vector.load %arg2[%c0_25, %c0_26, %c0_27, %c0_28] : memref<1x4x2x128xf32, #tpu.memory_space<vmem>>, vector<1x1x2x128xf32>
    %c1_29 = arith.constant 1 : index
    %c0_30 = arith.constant 0 : index
    %24 = memref.load %arg3[%c1_29, %c0_30] : memref<3x4xf32, #tpu.memory_space<smem>>
    %25 = vector.broadcast %24 : f32 to vector<1x1x2x128xf32>
    %26 = arith.mulf %23, %25 : vector<1x1x2x128xf32>
    %c0_31 = arith.constant 0 : index
    %c1_32 = arith.constant 1 : index
    %c0_33 = arith.constant 0 : index
    %c0_34 = arith.constant 0 : index
    %27 = vector.load %arg2[%c0_31, %c1_32, %c0_33, %c0_34] : memref<1x4x2x128xf32, #tpu.memory_space<vmem>>, vector<1x1x2x128xf32>
    %c1_35 = arith.constant 1 : index
    %c1_36 = arith.constant 1 : index
    %28 = memref.load %arg3[%c1_35, %c1_36] : memref<3x4xf32, #tpu.memory_space<smem>>
    %29 = vector.broadcast %28 : f32 to vector<1x1x2x128xf32>
    %30 = arith.mulf %27, %29 : vector<1x1x2x128xf32>
    %31 = arith.addf %26, %30 : vector<1x1x2x128xf32>
    %c0_37 = arith.constant 0 : index
    %c2_38 = arith.constant 2 : index
    %c0_39 = arith.constant 0 : index
    %c0_40 = arith.constant 0 : index
    %32 = vector.load %arg2[%c0_37, %c2_38, %c0_39, %c0_40] : memref<1x4x2x128xf32, #tpu.memory_space<vmem>>, vector<1x1x2x128xf32>
    %c1_41 = arith.constant 1 : index
    %c2_42 = arith.constant 2 : index
    %33 = memref.load %arg3[%c1_41, %c2_42] : memref<3x4xf32, #tpu.memory_space<smem>>
    %34 = vector.broadcast %33 : f32 to vector<1x1x2x128xf32>
    %35 = arith.mulf %32, %34 : vector<1x1x2x128xf32>
    %36 = arith.addf %31, %35 : vector<1x1x2x128xf32>
    %c0_43 = arith.constant 0 : index
    %c3_44 = arith.constant 3 : index
    %c0_45 = arith.constant 0 : index
    %c0_46 = arith.constant 0 : index
    %37 = vector.load %arg2[%c0_43, %c3_44, %c0_45, %c0_46] : memref<1x4x2x128xf32, #tpu.memory_space<vmem>>, vector<1x1x2x128xf32>
    %c1_47 = arith.constant 1 : index
    %c3_48 = arith.constant 3 : index
    %38 = memref.load %arg3[%c1_47, %c3_48] : memref<3x4xf32, #tpu.memory_space<smem>>
    %39 = vector.broadcast %38 : f32 to vector<1x1x2x128xf32>
    %40 = arith.mulf %37, %39 : vector<1x1x2x128xf32>
    %41 = arith.addf %36, %40 : vector<1x1x2x128xf32>
    %c1_49 = arith.constant 1 : index
    %42 = memref.load %arg4[%c1_49] : memref<3xf32, #tpu.memory_space<smem>>
    %43 = vector.broadcast %42 : f32 to vector<1x1x2x128xf32>
    %44 = arith.addf %41, %43 : vector<1x1x2x128xf32>
    %c0_50 = arith.constant 0 : index
    %c1_51 = arith.constant 1 : index
    %c0_52 = arith.constant 0 : index
    %c0_53 = arith.constant 0 : index
    %45 = vector.load %arg5[%c0_50, %c1_51, %c0_52, %c0_53] : memref<1x3x2x128xf32, #tpu.memory_space<vmem>>, vector<1x1x2x128xf32>
    tpu.vector_store %arg5[%c0_50, %c1_51, %c0_52, %c0_53], %44 {strides = array<i32>} : memref<1x3x2x128xf32, #tpu.memory_space<vmem>>, vector<1x1x2x128xf32>,
    %c0_54 = arith.constant 0 : index
    %c0_55 = arith.constant 0 : index
    %c0_56 = arith.constant 0 : index
    %c0_57 = arith.constant 0 : index
    %46 = vector.load %arg2[%c0_54, %c0_55, %c0_56, %c0_57] : memref<1x4x2x128xf32, #tpu.memory_space<vmem>>, vector<1x1x2x128xf32>
    %c2_58 = arith.constant 2 : index
    %c0_59 = arith.constant 0 : index
    %47 = memref.load %arg3[%c2_58, %c0_59] : memref<3x4xf32, #tpu.memory_space<smem>>
    %48 = vector.broadcast %47 : f32 to vector<1x1x2x128xf32>
    %49 = arith.mulf %46, %48 : vector<1x1x2x128xf32>
    %c0_60 = arith.constant 0 : index
    %c1_61 = arith.constant 1 : index
    %c0_62 = arith.constant 0 : index
    %c0_63 = arith.constant 0 : index
    %50 = vector.load %arg2[%c0_60, %c1_61, %c0_62, %c0_63] : memref<1x4x2x128xf32, #tpu.memory_space<vmem>>, vector<1x1x2x128xf32>
    %c2_64 = arith.constant 2 : index
    %c1_65 = arith.constant 1 : index
    %51 = memref.load %arg3[%c2_64, %c1_65] : memref<3x4xf32, #tpu.memory_space<smem>>
    %52 = vector.broadcast %51 : f32 to vector<1x1x2x128xf32>
    %53 = arith.mulf %50, %52 : vector<1x1x2x128xf32>
    %54 = arith.addf %49, %53 : vector<1x1x2x128xf32>
    %c0_66 = arith.constant 0 : index
    %c2_67 = arith.constant 2 : index
    %c0_68 = arith.constant 0 : index
    %c0_69 = arith.constant 0 : index
    %55 = vector.load %arg2[%c0_66, %c2_67, %c0_68, %c0_69] : memref<1x4x2x128xf32, #tpu.memory_space<vmem>>, vector<1x1x2x128xf32>
    %c2_70 = arith.constant 2 : index
    %c2_71 = arith.constant 2 : index
    %56 = memref.load %arg3[%c2_70, %c2_71] : memref<3x4xf32, #tpu.memory_space<smem>>
    %57 = vector.broadcast %56 : f32 to vector<1x1x2x128xf32>
    %58 = arith.mulf %55, %57 : vector<1x1x2x128xf32>
    %59 = arith.addf %54, %58 : vector<1x1x2x128xf32>
    %c0_72 = arith.constant 0 : index
    %c3_73 = arith.constant 3 : index
    %c0_74 = arith.constant 0 : index
    %c0_75 = arith.constant 0 : index
    %60 = vector.load %arg2[%c0_72, %c3_73, %c0_74, %c0_75] : memref<1x4x2x128xf32, #tpu.memory_space<vmem>>, vector<1x1x2x128xf32>
    %c2_76 = arith.constant 2 : index
    %c3_77 = arith.constant 3 : index
    %61 = memref.load %arg3[%c2_76, %c3_77] : memref<3x4xf32, #tpu.memory_space<smem>>
    %62 = vector.broadcast %61 : f32 to vector<1x1x2x128xf32>
    %63 = arith.mulf %60, %62 : vector<1x1x2x128xf32>
    %64 = arith.addf %59, %63 : vector<1x1x2x128xf32>
    %c2_78 = arith.constant 2 : index
    %65 = memref.load %arg4[%c2_78] : memref<3xf32, #tpu.memory_space<smem>>
    %66 = vector.broadcast %65 : f32 to vector<1x1x2x128xf32>
    %67 = arith.addf %64, %66 : vector<1x1x2x128xf32>
    %c0_79 = arith.constant 0 : index
    %c2_80 = arith.constant 2 : index
    %c0_81 = arith.constant 0 : index
    %c0_82 = arith.constant 0 : index
    %68 = vector.load %arg5[%c0_79, %c2_80, %c0_81, %c0_82] : memref<1x3x2x128xf32, #tpu.memory_space<vmem>>, vector<1x1x2x128xf32>
    tpu.vector_store %arg5[%c0_79, %c2_80, %c0_81, %c0_82], %67 {strides = array<i32>} : memref<1x3x2x128xf32, #tpu.memory_space<vmem>>, vector<1x1x2x128xf32>,
    return
  }
  func.func @transform_0(%arg0: i32, %arg1: i32) -> (i32, i32, i32, i32) {
    %c0_i32 = arith.constant 0 : i32
    %c0_i32_0 = arith.constant 0 : i32
    %c0_i32_1 = arith.constant 0 : i32
    return %arg0, %c0_i32, %arg1, %c0_i32_0 : i32, i32, i32, i32
  }
  func.func @transform_1(%arg0: i32, %arg1: i32) -> (i32, i32) {
    %c0_i32 = arith.constant 0 : i32
    %c0_i32_0 = arith.constant 0 : i32
    %c0_i32_1 = arith.constant 0 : i32
    return %c0_i32, %c0_i32_0 : i32, i32
  }
  func.func @transform_2(%arg0: i32, %arg1: i32) -> i32 {
    %c0_i32 = arith.constant 0 : i32
    %c0_i32_0 = arith.constant 0 : i32
    return %c0_i32 : i32
  }
  func.func @transform_3(%arg0: i32, %arg1: i32) -> (i32, i32, i32, i32) {
    %c0_i32 = arith.constant 0 : i32
    %c0_i32_0 = arith.constant 0 : i32
    %c0_i32_1 = arith.constant 0 : i32
    return %arg0, %c0_i32, %arg1, %c0_i32_0 : i32, i32, i32, i32
  }
}

</mosaic_0001>

<llo_original>
// kernel: tpu_custom_call.1
$region0: #{tpu_custom_call.1}
  #allocation0 [shape = 'u32[]', space=smem, size = 0x4, offset = 0x4, fixed_abs, tag = 'smem constant byte address 0x4 - core index']
  #allocation1 [shape = 'u32[144,128]{1,0:T(1,128)}', space=vmem, size = 0x12000, scoped, tag = 'internal scratch']
  %s0 = inlined_call_operand.hbm [shape: f32[2,4,2,128], index: 0, kind: input, shape index: {}]
  %s1 = inlined_call_operand.hbm [shape: f32[3,4], index: 1, kind: input, shape index: {}]
  %s2 = inlined_call_operand.vmem [shape: f32[3], index: 2, kind: input, shape index: {}]
  %s3 = inlined_call_operand.hbm [shape: f32[2,3,2,128], index: 3, kind: output, shape index: {}]
  %s4 = sld [smem:[#allocation0]]
  $region57: #{tpu_custom_call.1} parent=0
    _
  %s6 = ssub.s32 1, %s4
  %s7 = scalar_select 0, %s6, %s4
  $region1: #{tpu_custom_call.1} parent=0
    #allocation2 [shape = 'u8[8192]{0}', space=vmem, size = 0x2000, scoped, tag = 'input window, operand 0']
    #allocation3 [shape = 's32[2]{0}', space=sflag, size = 0x8, scoped, tag = 'scoped memory for tpu_custom_call.1']
    #allocation4 [shape = 's32[2]{0}', space=sflag, size = 0x8, scoped, tag = 'scoped memory for tpu_custom_call.1']
    #allocation5 [shape = 's32[2]{0}', space=sflag, size = 0x8, scoped, tag = 'scoped memory for tpu_custom_call.1']
    #allocation6 [shape = 's32[2]{0}', space=sflag, size = 0x8, scoped, tag = 'scoped memory for tpu_custom_call.1']
    #allocation7 [shape = 'u8[2048]{0}', space=smem, size = 0x800, scoped, tag = 'input window, operand 1, single buffered']
    #allocation8 [shape = 'u8[512]{0}', space=smem, size = 0x200, scoped, tag = 'input window, operand 2, single buffered']
    #allocation9 [shape = 'u8[6144]{0}', space=vmem, size = 0x1800, scoped, tag = 'output window, operand 0']
    %8 = vsyncpa [#allocation3], 0
    %s9 = scalar_lea.sflag [#allocation3], 1
    %10 = vsyncpa %s9, 0
    %11 = vsyncpa [#allocation5], 0
    %12 = vsyncpa [#allocation6], 0
    %13 = vsyncpa [#allocation4], 0
    %s14 = scalar_lea.sflag [#allocation4], 1
    %15 = vsyncpa %s14, 0
    loop: start=0, step=1, limit=4
    $region2: #{tpu_custom_call.1} parent=1 // loop_pre_header
      _
    $region3: #{tpu_custom_call.1} parent=1 // loop_header
      %s17 = sphi 0, %s21
      %p18 = scmp.ge.s32.totalorder %s17, 4
      %s24 = sphi 0, %s36
      %s25 = sphi 0, %s32
      %s26 = sphi 0, %s24
      %s27 = sphi 0, %s25
      %s28 = sphi 0, %s26
      %s29 = sphi 0, %s27
      %s41 = sphi 0, %s43
      %s44 = sphi 0, %s41
      %s45 = sphi 0, %s44
      %s61 = sphi 0, %s45
      %s65 = sphi 0, %s65
      %s67 = sphi 0, %s65
      %s68 = sphi 0, %s67
      %s82 = sphi 0, %s68
      %s86 = sphi 0, %s86
      %s88 = sphi 0, %s86
      %s89 = sphi 0, %s88
      %s103 = sphi 0, %s89
      %s111 = sphi 0, %s113
      %s114 = sphi 0, %s111
      %s115 = sphi 0, %s114
      %s131 = sphi 0, %s115
    $region4: #{tpu_custom_call.1} parent=1 // loop_header_branch
      %20 = sbr.rel (%p18) target = $region8
    $region5: #{tpu_custom_call.1} parent=1 // loop_body
      %s22 = ssub.s32 %s17, 1
      %s23 = ssub.s32 %s17, 2
      %s30 = sadd.s32 1, %s25
      %p31 = scmp.ge.s32.totalorder %s30, 1
      %s32 = scalar_select %p31, 0, %s30
      %s33 = sadd.s32 1, %s24
      %s34 = scalar_select %p31, %s33, %s24
      %p35 = scmp.ge.s32.totalorder %s34, 2
      %s36 = scalar_select %p35, 0, %s34
      %s37 = ssub.s32 %s24, %s36
      %s38 = ssub.s32 %s25, %s32
      %s39 = sor.u32 %s37, %s38
      %p40 = scmp.eq.s32.totalorder %s39, 0
      %s42 = sadd.s32 %s41, 1
      %s43 = scalar_select %p40, %s41, %s42
      %p46 = pneg %p40
      %p47 = scmp.eq.s32.totalorder %s17, 1
      %p48 = por %p46, %p47
      %p49 = scmp.ne.s32.totalorder %s41, %s44
      %p50 = scmp.eq.s32.totalorder %s17, 0
      %p51 = por %p49, %p50
      %p52 = scmp.ne.s32.totalorder %s41, %s44
      %p53 = scmp.eq.s32.totalorder %s22, 1
      %p54 = por %p52, %p53
      %p55 = scmp.ne.s32.totalorder %s44, %s45
      %p56 = scmp.eq.s32.totalorder %s22, 0
      %p57 = por %p55, %p56
      %p58 = scmp.ne.s32.totalorder %s44, %s45
      %p59 = scmp.eq.s32.totalorder %s23, 1
      %p60 = por %p58, %p59
      %p62 = scmp.ne.s32.totalorder %s45, %s61
      %p63 = scmp.eq.s32.totalorder %s23, 0
      %p64 = por %p62, %p63
      %s66 = sadd.s32 %s65, 1
      %p69 = scmp.eq.s32.totalorder %s17, 1
      %p70 = scmp.ne.s32.totalorder %s65, %s67
      %p71 = scmp.eq.s32.totalorder %s17, 0
      %p72 = por %p70, %p71
      %p73 = scmp.ne.s32.totalorder %s65, %s67
      %p74 = scmp.eq.s32.totalorder %s22, 1
      %p75 = por %p73, %p74
      %p76 = scmp.ne.s32.totalorder %s67, %s68
      %p77 = scmp.eq.s32.totalorder %s22, 0
      %p78 = por %p76, %p77
      %p79 = scmp.ne.s32.totalorder %s67, %s68
      %p80 = scmp.eq.s32.totalorder %s23, 1
      %p81 = por %p79, %p80
      %p83 = scmp.ne.s32.totalorder %s68, %s82
      %p84 = scmp.eq.s32.totalorder %s23, 0
      %p85 = por %p83, %p84
      %s87 = sadd.s32 %s86, 1
      %p90 = scmp.eq.s32.totalorder %s17, 1
      %p91 = scmp.ne.s32.totalorder %s86, %s88
      %p92 = scmp.eq.s32.totalorder %s17, 0
      %p93 = por %p91, %p92
      %p94 = scmp.ne.s32.totalorder %s86, %s88
      %p95 = scmp.eq.s32.totalorder %s22, 1
      %p96 = por %p94, %p95
      %p97 = scmp.ne.s32.totalorder %s88, %s89
      %p98 = scmp.eq.s32.totalorder %s22, 0
      %p99 = por %p97, %p98
      %p100 = scmp.ne.s32.totalorder %s88, %s89
      %p101 = scmp.eq.s32.totalorder %s23, 1
      %p102 = por %p100, %p101
      %p104 = scmp.ne.s32.totalorder %s89, %s103
      %p105 = scmp.eq.s32.totalorder %s23, 0
      %p106 = por %p104, %p105
      %s107 = ssub.s32 %s24, %s36
      %s108 = ssub.s32 %s25, %s32
      %s109 = sor.u32 %s107, %s108
      %p110 = scmp.eq.s32.totalorder %s109, 0
      %s112 = sadd.s32 %s111, 1
      %s113 = scalar_select %p110, %s111, %s112
      %p116 = pneg %p110
      %p117 = scmp.eq.s32.totalorder %s17, 1
      %p118 = por %p116, %p117
      %p119 = scmp.ne.s32.totalorder %s111, %s114
      %p120 = scmp.eq.s32.totalorder %s17, 0
      %p121 = por %p119, %p120
      %p122 = scmp.ne.s32.totalorder %s111, %s114
      %p123 = scmp.eq.s32.totalorder %s22, 1
      %p124 = por %p122, %p123
      %p125 = scmp.ne.s32.totalorder %s114, %s115
      %p126 = scmp.eq.s32.totalorder %s22, 0
      %p127 = por %p125, %p126
      %p128 = scmp.ne.s32.totalorder %s114, %s115
      %p129 = scmp.eq.s32.totalorder %s23, 1
      %p130 = por %p128, %p129
      %p132 = scmp.ne.s32.totalorder %s115, %s131
      %p133 = scmp.eq.s32.totalorder %s23, 0
      %p134 = por %p132, %p133
      %p135 = scmp.le.s32.totalorder 1, %s17
      %p136 = scmp.lt.s32.totalorder %s17, 3
      %p137 = pnand %p135, %p136
      %p138 = pneg %p137
      // Predicated region
      $region9: #{tpu_custom_call.1} parent=5 // pred_check
        _
      $region10: #{tpu_custom_call.1} parent=5 // pred_check_branch
        %140 = sbr.rel (%p137) target = $region12
      $region11: #{tpu_custom_call.1} parent=5 // pred_region
        %s141 = ssub.s32 %s17, 1
        // Predicated region
        $region13: #{tpu_custom_call.1} parent=11 // pred_check
          %p142 = pneg %p78
        $region14: #{tpu_custom_call.1} parent=11 // pred_check_branch
          %144 = sbr.rel (%p142) target = $region16
        $region15: #{tpu_custom_call.1} parent=11 // pred_region
          %s146 = ssub.s32 64, 64
          %147 = vsyncadd [#allocation5], %s146
          %150 = dma.hbm_to_smem %s1, 64, [#allocation7], [#allocation5]
        $region16: #{tpu_custom_call.1} parent=11 // pred_fallthru
          _
        // Predicated region
        $region17: #{tpu_custom_call.1} parent=11 // pred_check
          %p151 = pneg %p99
        $region18: #{tpu_custom_call.1} parent=11 // pred_check_branch
          %153 = sbr.rel (%p151) target = $region20
        $region19: #{tpu_custom_call.1} parent=11 // pred_region
          %s155 = ssub.s32 16, 16
          %156 = vsyncadd [#allocation6], %s155
          %s158 = sshll.u32 %s2, 4
          %s159 = int_to_ptr.vmem [resolvable:$true] %s158
          %161 = dma.vmem_to_smem %s159, 16, [#allocation8], [#allocation6]
        $region20: #{tpu_custom_call.1} parent=11 // pred_fallthru
          _
      $region12: #{tpu_custom_call.1} parent=5 // pred_fallthru
        _
      %p162 = scmp.lt.s32.totalorder %s17, 2
      // Predicated region
      $region21: #{tpu_custom_call.1} parent=5 // pred_check
        %p163 = pneg %p162
      $region22: #{tpu_custom_call.1} parent=5 // pred_check_branch
        %165 = sbr.rel (%p163) target = $region24
      $region23: #{tpu_custom_call.1} parent=5 // pred_region
        // Predicated region
        $region25: #{tpu_custom_call.1} parent=23 // pred_check
          %p166 = pneg %p51
        $region26: #{tpu_custom_call.1} parent=23 // pred_check_branch
          %168 = sbr.rel (%p166) target = $region28
        $region27: #{tpu_custom_call.1} parent=23 // pred_region
          %s169 = sand.u32 %s41, 1
          %s170 = scalar_lea.sflag [#allocation3], %s169
          %s171 = sand.u32 %s41, 1
          %s172 = smul.addr %s171, 8
          %s173 = scalar_lea.vmem [#allocation2], %s172
          %s175 = ssub.s32 128, 128
          %176 = vsyncadd %s170, %s175
          %s177 = smul.addr %s24, 4
          %s178 = sadd.s32 %s25, %s177
          %s179 = smul.addr %s178, 32
          %s180 = scalar_lea.hbm %s0, %s179
          %s181 = sshll.u32 %s173, 4
          %s182 = int_to_ptr.vmem [resolvable:$true] %s181
          %187 = dma.hbm_to_vmem [thread:$0]  %s180, 128, %s182, %s170, 32, 32, 2
        $region28: #{tpu_custom_call.1} parent=23 // pred_fallthru
          _
      $region24: #{tpu_custom_call.1} parent=5 // pred_fallthru
        _
      %p188 = scmp.le.s32.totalorder 1, %s17
      %p189 = scmp.lt.s32.totalorder %s17, 3
      %p190 = pnand %p188, %p189
      %p191 = pneg %p190
      // Predicated region
      $region29: #{tpu_custom_call.1} parent=5 // pred_check
        _
      $region30: #{tpu_custom_call.1} parent=5 // pred_check_branch
        %193 = sbr.rel (%p190) target = $region32
      $region31: #{tpu_custom_call.1} parent=5 // pred_region
        %s194 = ssub.s32 %s17, 1
        %s195 = sand.u32 %s44, 1
        %s196 = scalar_lea.sflag [#allocation3], %s195
        %s197 = sand.u32 %s44, 1
        %s198 = smul.addr %s197, 8
        %s199 = scalar_lea.vmem [#allocation2], %s198
        // Predicated region
        $region33: #{tpu_custom_call.1} parent=31 // pred_check
          %p200 = pneg %p57
        $region34: #{tpu_custom_call.1} parent=31 // pred_check_branch
          %202 = sbr.rel (%p200) target = $region36
        $region35: #{tpu_custom_call.1} parent=31 // pred_region
          %203 = dma.done %s196, 128
        $region36: #{tpu_custom_call.1} parent=31 // pred_fallthru
          _
        // Predicated region
        $region37: #{tpu_custom_call.1} parent=31 // pred_check
          %p204 = pneg %p78
        $region38: #{tpu_custom_call.1} parent=31 // pred_check_branch
          %206 = sbr.rel (%p204) target = $region40
        $region39: #{tpu_custom_call.1} parent=31 // pred_region
          %207 = dma.done [#allocation5], 64
        $region40: #{tpu_custom_call.1} parent=31 // pred_fallthru
          _
        // Predicated region
        $region41: #{tpu_custom_call.1} parent=31 // pred_check
          %p208 = pneg %p99
        $region42: #{tpu_custom_call.1} parent=31 // pred_check_branch
          %210 = sbr.rel (%p208) target = $region44
        $region43: #{tpu_custom_call.1} parent=31 // pred_region
          %211 = dma.done [#allocation6], 16
        $region44: #{tpu_custom_call.1} parent=31 // pred_fallthru
          _
        %212 = sfence
        %s213 = sand.u32 %s44, 1
        %s214 = scalar_lea.sflag [#allocation3], %s213
        %s215 = sand.u32 %s44, 1
        %s216 = smul.addr %s215, 8
        %s217 = scalar_lea.vmem [#allocation2], %s216
        %p218 = pneg %p57
        %p219 = pneg %p54
        %p220 = pneg %p78
        %p221 = pneg %p75
        %p222 = pneg %p99
        %p223 = pneg %p96
        %p224 = pneg %p127
        %p225 = pneg %p124
        %s226 = sand.u32 %s114, 1
        %s227 = scalar_lea.sflag [#allocation4], %s226
        %s228 = sand.u32 %s114, 1
        %s229 = smul.addr %s228, 6
        %s230 = scalar_lea.vmem [#allocation9], %s229
        %v231 = vld [vmem:[%s199] sm:$0x3]
        %s232 = sld [smem:[#allocation7]]
        %v233 = vstv %s232
        %v234 = vmul.f32 %v231, %v233
        %s235 = scalar_lea.vmem %s199, 2 [#allocation2]
        %v236 = vld [vmem:[%s235] sm:$0x3]
        %s237 = sld [smem:[#allocation7 + $0x1]]
        %v238 = vstv %s237
        %v239 = vmul.f32 %v236, %v238
        %v240 = vadd.f32 %v234, %v239
        %s241 = scalar_lea.vmem %s199, 4 [#allocation2]
        %v242 = vld [vmem:[%s241] sm:$0x3]
        %s243 = sld [smem:[#allocation7 + $0x2]]
        %v244 = vstv %s243
        %v245 = vmul.f32 %v242, %v244
        %v246 = vadd.f32 %v240, %v245
        %s247 = scalar_lea.vmem %s199, 6 [#allocation2]
        %v248 = vld [vmem:[%s247] sm:$0x3]
        %s249 = sld [smem:[#allocation7 + $0x3]]
        %v250 = vstv %s249
        %v251 = vmul.f32 %v248, %v250
        %v252 = vadd.f32 %v246, %v251
        %s253 = sld [smem:[#allocation8]]
        %v254 = vstv %s253
        %v255 = vadd.f32 %v252, %v254
        %256 = vst [vmem:[%s230] sm:$0x3] %v255
        %v257 = vld [vmem:[%s199] sm:$0x3]
        %s258 = sld [smem:[#allocation7 + $0x80]]
        %v259 = vstv %s258
        %v260 = vmul.f32 %v257, %v259
        %v261 = vld [vmem:[%s235] sm:$0x3]
        %s262 = sld [smem:[#allocation7 + $0x81]]
        %v263 = vstv %s262
        %v264 = vmul.f32 %v261, %v263
        %v265 = vadd.f32 %v260, %v264
        %v266 = vld [vmem:[%s241] sm:$0x3]
        %s267 = sld [smem:[#allocation7 + $0x82]]
        %v268 = vstv %s267
        %v269 = vmul.f32 %v266, %v268
        %v270 = vadd.f32 %v265, %v269
        %v271 = vld [vmem:[%s247] sm:$0x3]
        %s272 = sld [smem:[#allocation7 + $0x83]]
        %v273 = vstv %s272
        %v274 = vmul.f32 %v271, %v273
        %v275 = vadd.f32 %v270, %v274
        %s276 = sld [smem:[#allocation8 + $0x1]]
        %v277 = vstv %s276
        %v278 = vadd.f32 %v275, %v277
        %s279 = scalar_lea.vmem %s230, 2 [#allocation9]
        %280 = vst [vmem:[%s279] sm:$0x3] %v278
        %v281 = vld [vmem:[%s199] sm:$0x3]
        %s282 = sld [smem:[#allocation7 + $0x100]]
        %v283 = vstv %s282
        %v284 = vmul.f32 %v281, %v283
        %v285 = vld [vmem:[%s235] sm:$0x3]
        %s286 = sld [smem:[#allocation7 + $0x101]]
        %v287 = vstv %s286
        %v288 = vmul.f32 %v285, %v287
        %v289 = vadd.f32 %v284, %v288
        %v290 = vld [vmem:[%s241] sm:$0x3]
        %s291 = sld [smem:[#allocation7 + $0x102]]
        %v292 = vstv %s291
        %v293 = vmul.f32 %v290, %v292
        %v294 = vadd.f32 %v289, %v293
        %v295 = vld [vmem:[%s247] sm:$0x3]
        %s296 = sld [smem:[#allocation7 + $0x103]]
        %v297 = vstv %s296
        %v298 = vmul.f32 %v295, %v297
        %v299 = vadd.f32 %v294, %v298
        %s300 = sld [smem:[#allocation8 + $0x2]]
        %v301 = vstv %s300
        %v302 = vadd.f32 %v299, %v301
        %s303 = scalar_lea.vmem %s230, 4 [#allocation9]
        %304 = vst [vmem:[%s303] sm:$0x3] %v302
        %s305 = sand.u32 %s114, 1
        %s306 = scalar_lea.sflag [#allocation4], %s305
        %s307 = sand.u32 %s114, 1
        %s308 = smul.addr %s307, 6
        %s309 = scalar_lea.vmem [#allocation9], %s308
        // Predicated region
        $region45: #{tpu_custom_call.1} parent=31 // pred_check
          %p310 = pneg %p124
        $region46: #{tpu_custom_call.1} parent=31 // pred_check_branch
          %312 = sbr.rel (%p310) target = $region48
        $region47: #{tpu_custom_call.1} parent=31 // pred_region
          %s314 = ssub.s32 96, 96
          %315 = vsyncadd %s306, %s314
          %s316 = smul.addr %s26, 3
          %s317 = sadd.s32 %s27, %s316
          %s318 = smul.addr %s317, 32
          %s319 = scalar_lea.hbm %s3, %s318
          %s320 = sshll.u32 %s309, 4
          %s321 = int_to_ptr.vmem [resolvable:$true] %s320
          %326 = dma.vmem_to_hbm [thread:$0]  %s321, 96, %s319, %s306, 32, 32, 2
        $region48: #{tpu_custom_call.1} parent=31 // pred_fallthru
          _
      $region32: #{tpu_custom_call.1} parent=5 // pred_fallthru
        _
      %p327 = scmp.le.s32.totalorder 2, %s17
      // Predicated region
      $region49: #{tpu_custom_call.1} parent=5 // pred_check
        %p328 = pneg %p327
      $region50: #{tpu_custom_call.1} parent=5 // pred_check_branch
        %330 = sbr.rel (%p328) target = $region52
      $region51: #{tpu_custom_call.1} parent=5 // pred_region
        %s331 = ssub.s32 %s17, 2
        // Predicated region
        $region53: #{tpu_custom_call.1} parent=51 // pred_check
          %p332 = pneg %p130
        $region54: #{tpu_custom_call.1} parent=51 // pred_check_branch
          %334 = sbr.rel (%p332) target = $region56
        $region55: #{tpu_custom_call.1} parent=51 // pred_region
          %s335 = sand.u32 %s115, 1
          %s336 = scalar_lea.sflag [#allocation4], %s335
          %s337 = sand.u32 %s115, 1
          %s338 = smul.addr %s337, 6
          %s339 = scalar_lea.vmem [#allocation9], %s338
          %340 = dma.done %s336, 96
        $region56: #{tpu_custom_call.1} parent=51 // pred_fallthru
          _
      $region52: #{tpu_custom_call.1} parent=5 // pred_fallthru
        _
    $region6: #{tpu_custom_call.1} parent=1 // loop_footer
      %s21 = sadd.s32 1, %s17
    $region7: #{tpu_custom_call.1} parent=1 // loop_footer_branch
      %16 = sbr.rel target = $region3
    $region8: #{tpu_custom_call.1} parent=1 // loop_exit
      _
    %341 = vsyncpa [#allocation3], 1
    %s342 = scalar_lea.sflag [#allocation3], 1
    %343 = vsyncpa %s342, 1
    %344 = vsyncpa [#allocation4], 1
    %s345 = scalar_lea.sflag [#allocation4], 1
    %346 = vsyncpa %s345, 1
    %347 = vsyncpa [#allocation5], 1
    %s348 = scalar_lea.sflag [#allocation5], 1
    %349 = vsyncpa %s348, 1
    %350 = vsyncpa [#allocation6], 1
    %s351 = scalar_lea.sflag [#allocation6], 1
    %352 = vsyncpa %s351, 1

</llo_original>
